<compile_context>
chip_gen: v5e
topology: v5e:2x2
jax: 0.10.0
libtpu: 0.0.40
codegen_flags: <defaults>
</compile_context>

<pallas_src>
import math

import jax
import jax.numpy as jnp
import numpy as np
from jax import lax
from jax.experimental import pallas as pl
from jax.experimental.pallas import tpu as pltpu

COMPUTE_DTYPE = jnp.bfloat16     # MXU operand dtype (accumulation is always f32)
MASK_VALUE = -1e30               # finite "-inf" so online softmax never produces NaN


def _default_vmem_limit():
    """Generation-aware scoped-VMEM budget: ~85% of physical VMEM per core
    (~109 MiB on v5e/v6e, ~54 MiB on v7x); conservative fallback otherwise."""
    try:
        cap = getattr(pltpu.get_tpu_info(), "vmem_capacity_bytes", None)
        if cap:
            return int(cap * 0.85)
    except Exception:
        pass
    return 48 * 1024 * 1024


VMEM_LIMIT = _default_vmem_limit()


# --------------------------- tiled projection matmul ---------------------------

def _matmul_kernel_2d(x_ref, w_ref, o_ref):
    o_ref[...] = jnp.dot(x_ref[...], w_ref[...],
                         preferred_element_type=jnp.float32).astype(o_ref.dtype)


def _matmul_kernel_3d(x_ref, w_ref, o_ref, acc_ref):
    @pl.when(pl.program_id(2) == 0)
    def _init():
        acc_ref[...] = jnp.zeros_like(acc_ref)

    acc_ref[...] += jnp.dot(x_ref[...], w_ref[...],
                            preferred_element_type=jnp.float32)

    @pl.when(pl.program_id(2) == pl.num_programs(2) - 1)
    def _store():
        o_ref[...] = acc_ref[...].astype(o_ref.dtype)


def pallas_matmul(x, w, out_dtype=None, tm=256, tn=256, tk=512,
                  full_k_threshold=4096):
    """x:[M,K] @ w:[K,N] -> [M,N]; bf16 MXU operands, f32 accumulation.

    When K fits comfortably in VMEM, a 2-D grid with full-K blocks is used (no
    accumulator scratch, no reduction axis); otherwise fall back to a K-tiled
    3-D grid with an f32 VMEM accumulator."""
    M, K = x.shape
    K2, N = w.shape
    assert K == K2
    out_dtype = out_dtype or x.dtype
    x = x.astype(COMPUTE_DTYPE)
    w = w.astype(COMPUTE_DTYPE)
    tm, tn = min(tm, M), min(tn, N)
    assert M % tm == 0 and N % tn == 0, (M, N, tm, tn)

    if K <= full_k_threshold:
        return pl.pallas_call(
            _matmul_kernel_2d,
            out_shape=jax.ShapeDtypeStruct((M, N), out_dtype),
            grid=(M // tm, N // tn),
            in_specs=[pl.BlockSpec((tm, K), lambda i, j: (i, 0)),
                      pl.BlockSpec((K, tn), lambda i, j: (0, j))],
            out_specs=pl.BlockSpec((tm, tn), lambda i, j: (i, j)),
            compiler_params=pltpu.CompilerParams(
                dimension_semantics=("parallel", "parallel"),
                vmem_limit_bytes=VMEM_LIMIT),
        )(x, w)

    tk = min(tk, K)
    assert K % tk == 0
    return pl.pallas_call(
        _matmul_kernel_3d,
        out_shape=jax.ShapeDtypeStruct((M, N), out_dtype),
        grid=(M // tm, N // tn, K // tk),
        in_specs=[pl.BlockSpec((tm, tk), lambda i, j, k: (i, k)),
                  pl.BlockSpec((tk, tn), lambda i, j, k: (k, j))],
        out_specs=pl.BlockSpec((tm, tn), lambda i, j, k: (i, j)),
        scratch_shapes=[pltpu.VMEM((tm, tn), jnp.float32)],
        compiler_params=pltpu.CompilerParams(
            dimension_semantics=("parallel", "parallel", "arbitrary"),
            vmem_limit_bytes=VMEM_LIMIT),
    )(x, w)


# ------------------ output projection fused with the head merge -----------------

def _head_merge_kernel(o_ref, w_ref, out_ref, acc_ref):
    @pl.when(pl.program_id(3) == 0)
    def _init():
        acc_ref[...] = jnp.zeros_like(acc_ref)

    acc_ref[...] += jnp.dot(o_ref[...], w_ref[...],
                            preferred_element_type=jnp.float32)

    @pl.when(pl.program_id(3) == pl.num_programs(3) - 1)
    def _store():
        out_ref[...] = acc_ref[...].astype(out_ref.dtype)


def pallas_head_merge_matmul(o_heads, w, out_dtype=None, tm=256, tn=256):
    """einsum('bhsd,(hd)n->bsn'): output projection with the head-concat folded
    into the reduction axis, so the head-major attention output never needs an
    HBM transpose back to [B,S,H]."""
    B, NH, S, HD = o_heads.shape
    H, N = w.shape
    assert H == NH * HD
    out_dtype = out_dtype or o_heads.dtype
    tm, tn = min(tm, S), min(tn, N)
    assert S % tm == 0 and N % tn == 0, (S, N, tm, tn)
    return pl.pallas_call(
        _head_merge_kernel,
        out_shape=jax.ShapeDtypeStruct((B, S, N), out_dtype),
        grid=(B, S // tm, N // tn, NH),
        in_specs=[pl.BlockSpec((None, None, tm, HD), lambda b, i, j, h: (b, h, i, 0)),
                  pl.BlockSpec((HD, tn), lambda b, i, j, h: (h, j))],
        out_specs=pl.BlockSpec((None, tm, tn), lambda b, i, j, h: (b, i, j)),
        scratch_shapes=[pltpu.VMEM((tm, tn), jnp.float32)],
        compiler_params=pltpu.CompilerParams(
            dimension_semantics=("parallel", "parallel", "parallel", "arbitrary"),
            vmem_limit_bytes=VMEM_LIMIT),
    )(o_heads.astype(COMPUTE_DTYPE), w.astype(COMPUTE_DTYPE))


# ----------------------- RoPE + head-split (single pass) ------------------------

def _make_rope_split_kernel(*, num_heads, head_dim, hidden, scaling):
    NH, HD, H = num_heads, head_dim, hidden
    half = HD // 2

    def kernel(qkv_ref, ra_ref, rb_ref, q_ref, k_ref, v_ref):
        ra = ra_ref[...]                        # [ts, HD] f32 (hoisted out of loop)
        rb = rb_ref[...]
        for h in range(NH):                     # static, small
            xq = qkv_ref[:, h * HD:(h + 1) * HD].astype(jnp.float32)
            xk = qkv_ref[:, H + h * HD:H + (h + 1) * HD].astype(jnp.float32)
            # De-interleaved head layout (folded into the weights at load time):
            # the RoPE partner element is a half rotation along lanes (XLU roll).
            q_rot = (xq * ra + pltpu.roll(xq, half, 1) * rb) * scaling
            k_rot = xk * ra + pltpu.roll(xk, half, 1) * rb
            q_ref[h] = q_rot.astype(q_ref.dtype)
            k_ref[h] = k_rot.astype(k_ref.dtype)
            v_ref[h] = qkv_ref[:, 2 * H + h * HD:2 * H + (h + 1) * HD].astype(v_ref.dtype)

    return kernel


def pallas_rope_split(qkv, rope_a, rope_b, *, num_heads, head_dim, scaling, ts=256):
    """[B,S,3H] fused projection -> head-major q_rot/k_rot/v [B,NH,S,HD] bf16.

    RoPE (and the 1/sqrt(head_dim) q-scaling) is applied exactly once per element
    here, so the attention kernels never re-rotate K inside the KV loop and never
    DMA rope coefficient tables per KV step."""
    B, S, H3 = qkv.shape
    H = num_heads * head_dim
    assert H3 == 3 * H
    ts = min(ts, S)
    assert S % ts == 0
    hd_shape = jax.ShapeDtypeStruct((B, num_heads, S, head_dim), COMPUTE_DTYPE)

    def _out_spec():
        return pl.BlockSpec((None, num_heads, ts, head_dim),
                            lambda b, si: (b, 0, si, 0))

    return pl.pallas_call(
        _make_rope_split_kernel(num_heads=num_heads, head_dim=head_dim,
                                hidden=H, scaling=scaling),
        out_shape=(hd_shape, hd_shape, hd_shape),
        grid=(B, S // ts),
        in_specs=[pl.BlockSpec((None, ts, 3 * H), lambda b, si: (b, si, 0)),
                  pl.BlockSpec((ts, head_dim), lambda b, si: (si, 0)),
                  pl.BlockSpec((ts, head_dim), lambda b, si: (si, 0))],
        out_specs=(_out_spec(), _out_spec(), _out_spec()),
        compiler_params=pltpu.CompilerParams(
            dimension_semantics=("parallel", "parallel"),
            vmem_limit_bytes=VMEM_LIMIT),
    )(qkv, rope_a.astype(jnp.float32), rope_b.astype(jnp.float32))


# ----------------------- attention kernel: full-key variant ---------------------
# Used only when output_attentions=True (normalized weights must be emitted).

def _make_attn_full_kernel(*, has_mask, causal, tq):
    def kernel(*refs):
        i = 1 if has_mask else 0
        q_ref, k_ref, v_ref, o_ref, w_ref = refs[i:i + 5]

        s = lax.dot_general(q_ref[...], k_ref[...],        # [tq, S]
                            (((1,), (1,)), ((), ())),
                            preferred_element_type=jnp.float32)
        if has_mask:
            s = s + refs[0][...].astype(jnp.float32)
        if causal:
            row = tq * pl.program_id(2) + lax.broadcasted_iota(jnp.int32, s.shape, 0)
            col = lax.broadcasted_iota(jnp.int32, s.shape, 1)
            s = jnp.where(col <= row, s, MASK_VALUE)

        s = s - jnp.max(s, axis=-1, keepdims=True)
        p = jnp.exp(s)
        p = p / jnp.sum(p, axis=-1, keepdims=True)          # exact normalization
        p = p.astype(w_ref.dtype)                           # torch: weights in act dtype
        w_ref[...] = p
        o_ref[...] = jnp.dot(p.astype(COMPUTE_DTYPE), v_ref[...],
                             preferred_element_type=jnp.float32).astype(o_ref.dtype)

    return kernel


# --------------------- attention kernel: flash / KV-tiled variant ---------------

def _make_attn_flash_kernel(*, has_mask, causal, tq, tk):
    def kernel(*refs):
        i = 1 if has_mask else 0
        q_ref, k_ref, v_ref, o_ref, m_sc, l_sc, acc_sc = refs[i:i + 7]
        qi = pl.program_id(2)
        ki = pl.program_id(3)

        @pl.when(ki == 0)
        def _init():
            m_sc[...] = jnp.full_like(m_sc, MASK_VALUE)
            l_sc[...] = jnp.zeros_like(l_sc)
            acc_sc[...] = jnp.zeros_like(acc_sc)

        def update():
            # q/k/v blocks are [G, tq|tk, HD] bf16, pre-rotated (RoPE + scaling done).
            s = lax.dot_general(q_ref[...], k_ref[...],     # [G, tq, tk]
                                (((2,), (2,)), ((0,), (0,))),
                                preferred_element_type=jnp.float32)
            if has_mask:
                s = s + refs[0][...].astype(jnp.float32)[None]
            if causal:
                row = tq * qi + lax.broadcasted_iota(jnp.int32, s.shape, 1)
                col = tk * ki + lax.broadcasted_iota(jnp.int32, s.shape, 2)
                s = jnp.where(col <= row, s, MASK_VALUE)
            m_prev = m_sc[...]
            m_new = jnp.maximum(m_prev, jnp.max(s, axis=-1, keepdims=True))
            alpha = jnp.exp(m_prev - m_new)
            # NOTE: exp stays in f32 for online-softmax robustness; bf16 exp is a
            # possible v6e/v7x micro-opt once the kernel is EUP-bound.
            p = jnp.exp(s - m_new)
            l_sc[...] = alpha * l_sc[...] + jnp.sum(p, axis=-1, keepdims=True)
            acc_sc[...] = alpha * acc_sc[...] + lax.dot_general(
                p.astype(COMPUTE_DTYPE), v_ref[...],
                (((2,), (1,)), ((0,), (0,))),
                preferred_element_type=jnp.float32)          # [G, tq, HD]
            m_sc[...] = m_new

        if causal:
            # Compute only blocks that intersect the diagonal / below it.
            @pl.when(tk * ki <= tq * qi + (tq - 1))
            def _masked_update():
                update()
        else:
            update()

        @pl.when(ki == pl.num_programs(3) - 1)
        def _finalize():
            o_ref[...] = (acc_sc[...] * pl.reciprocal(l_sc[...], approx=True)
                          ).astype(o_ref.dtype)

    return kernel


# -------------------------------- attention wrapper -----------------------------

def pallas_attention(q, k, v, mask, *, causal, output_attentions,
                     tq=256, tk=256, head_group=None):
    """q/k/v: [B, NH, S, HD] bf16, already RoPE-rotated (q also pre-scaled).
    mask: optional additive [B, S, S] f32 (module-parity path; prefer causal=True
    for in-kernel masking with no HBM mask traffic).
    Returns (attention output [B, NH, S, HD], optional weights [B, NH, S, S])."""
    B, NH, S, HD = q.shape
    assert HD % 128 == 0, "pad head_dim to a multiple of 128 for lane-dense tiles"
    tq, tk = min(tq, S), min(tk, S)
    assert S % tq == 0 and S % tk == 0
    has_mask = mask is not None
    out_dtype = q.dtype

    if output_attentions:
        grid = (B, NH, S // tq)
        in_specs, inputs = [], []
        if has_mask:
            in_specs.append(pl.BlockSpec((None, tq, S), lambda b, h, qi: (b, qi, 0)))
            inputs.append(mask)
        in_specs += [
            pl.BlockSpec((None, None, tq, HD), lambda b, h, qi: (b, h, qi, 0)),
            pl.BlockSpec((None, None, S, HD), lambda b, h, qi: (b, h, 0, 0)),
            pl.BlockSpec((None, None, S, HD), lambda b, h, qi: (b, h, 0, 0)),
        ]
        inputs += [q, k, v]
        out, w = pl.pallas_call(
            _make_attn_full_kernel(has_mask=has_mask, causal=causal, tq=tq),
            out_shape=(jax.ShapeDtypeStruct((B, NH, S, HD), out_dtype),
                       jax.ShapeDtypeStruct((B, NH, S, S), out_dtype)),
            grid=grid,
            in_specs=in_specs,
            out_specs=(pl.BlockSpec((None, None, tq, HD), lambda b, h, qi: (b, h, qi, 0)),
                       pl.BlockSpec((None, None, tq, S), lambda b, h, qi: (b, h, qi, 0))),
            compiler_params=pltpu.CompilerParams(
                dimension_semantics=("parallel", "parallel", "parallel"),
                vmem_limit_bytes=VMEM_LIMIT),
        )(*inputs)
        return out, w

    # ---- flash / KV-tiled path (module default: output_attentions=False) ----
    if head_group is None:
        # Group as many heads as fit a conservative per-block budget (keeps the
        # enlarged tiles comfortably inside v7x's 64 MiB/TC with double-buffering).
        per_head = (tq + 2 * tk) * HD * 2 + tq * HD * 4 + tq * HD * 2
        head_group = max(1, min(NH, (8 << 20) // max(per_head, 1)))
    G = max(1, min(head_group, NH))
    while NH % G:
        G -= 1

    if causal:
        def kv_block(qi, ki):
            # Clamp above-diagonal KV block indices to the last valid block: the
            # repeated index means Pallas skips the DMA (compute is skipped by
            # pl.when), so causal attention does ~half the HBM reads.
            return jnp.minimum(ki, (qi * tq + tq - 1) // tk)
    else:
        def kv_block(qi, ki):
            return ki

    grid = (B, NH // G, S // tq, S // tk)   # leading parallel axes: keep B*(NH//G)
                                            # >= 2 for v7x's two TensorCores.
    in_specs, inputs = [], []
    if has_mask:
        in_specs.append(pl.BlockSpec(
            (None, tq, tk), lambda b, g, qi, ki: (b, qi, kv_block(qi, ki))))
        inputs.append(mask)
    in_specs += [
        pl.BlockSpec((None, G, tq, HD), lambda b, g, qi, ki: (b, g, qi, 0)),
        pl.BlockSpec((None, G, tk, HD), lambda b, g, qi, ki: (b, g, kv_block(qi, ki), 0)),
        pl.BlockSpec((None, G, tk, HD), lambda b, g, qi, ki: (b, g, kv_block(qi, ki), 0)),
    ]
    inputs += [q, k, v]
    out = pl.pallas_call(
        _make_attn_flash_kernel(has_mask=has_mask, causal=causal, tq=tq, tk=tk),
        out_shape=jax.ShapeDtypeStruct((B, NH, S, HD), out_dtype),
        grid=grid,
        in_specs=in_specs,
        out_specs=pl.BlockSpec((None, G, tq, HD), lambda b, g, qi, ki: (b, g, qi, 0)),
        scratch_shapes=[pltpu.VMEM((G, tq, 1), jnp.float32),     # running max
                        pltpu.VMEM((G, tq, 1), jnp.float32),     # running denom
                        pltpu.VMEM((G, tq, HD), jnp.float32)],   # accumulator
        compiler_params=pltpu.CompilerParams(
            dimension_semantics=("parallel", "parallel", "parallel", "arbitrary"),
            vmem_limit_bytes=VMEM_LIMIT),
    )(*inputs)
    return out, None


# ---------------------------- one-time parameter prep ---------------------------

def prepare_attention_params(wqkv, wo, frequency_cis, *, num_heads, head_dim):
    """Load-time transform of the torch-style weights / RoPE tables (run ONCE).

    * Q/K rows of wqkv get a per-head even/odd de-interleave permutation so the
      in-kernel RoPE partner is a plain half rotation (pltpu.roll).  The same
      permutation is applied to both Q and K, so scores / weights / outputs are
      mathematically unchanged (V and wo untouched).
    * Weights transposed to [in, out] and cast to bf16 here, not per forward.
    * frequency_cis [Smax, HD/2, 2, 2] folded into two [Smax, HD] tables
      (coefficient on self / on the rolled partner) in the de-interleaved layout.
    """
    H = num_heads * head_dim
    half = head_dim // 2
    d_perm = np.concatenate([np.arange(half) * 2, np.arange(half) * 2 + 1])
    head_perm = (np.arange(num_heads)[:, None] * head_dim + d_perm[None, :]).reshape(-1)
    qkv_perm = np.concatenate([head_perm, H + head_perm, 2 * H + np.arange(H)])
    wqkv_t = jnp.take(jnp.asarray(wqkv),
                      jnp.asarray(qkv_perm, dtype=jnp.int32), axis=0).T     # [H, 3H]

    fc = jnp.asarray(frequency_cis, jnp.float32)            # [Smax, HD/2, 2, 2]
    f00, f01 = fc[:, :, 0, 0], fc[:, :, 0, 1]
    f10, f11 = fc[:, :, 1, 0], fc[:, :, 1, 1]
    rope_a = jnp.concatenate([f00, f11], axis=-1)            # coeff on x[d]
    rope_b = jnp.concatenate([f01, f10], axis=-1)            # coeff on partner

    return {
        "wqkv_t": wqkv_t.astype(COMPUTE_DTYPE),               # [H, 3H]
        "wo_t": jnp.asarray(wo).T.astype(COMPUTE_DTYPE),      # [H, H]
        "rope_a": rope_a,                                     # [Smax, HD] f32
        "rope_b": rope_b,                                     # [Smax, HD] f32
        "num_heads": num_heads,
        "head_dim": head_dim,
    }


# ---------------------------------- forward pass --------------------------------

def attention_block_forward(x, params, attention_mask=None, *, causal=False,
                            output_attentions=False, token_idx=None,
                            tq=256, tk=256, head_group=None):
    """Mirrors AttentionBlock.forward (eval mode); params from prepare_attention_params."""
    if x.ndim != 3:
        raise ValueError(f"Expected 3D input, got {x.ndim}D")
    del token_idx   # TODO(synk): kv_cache.update (decode) branch not implemented.
    num_heads, head_dim = params["num_heads"], params["head_dim"]
    B, S, H = x.shape
    assert H == num_heads * head_dim
    scaling = 1.0 / math.sqrt(head_dim)

    # 1) fused QKV projection -> [B, S, 3H] bf16
    qkv = pallas_matmul(x.reshape(B * S, H), params["wqkv_t"]).reshape(B, S, 3 * H)

    # 2) RoPE applied once (outside the attention KV loop) + split to head-major
    q_rot, k_rot, v_h = pallas_rope_split(
        qkv, params["rope_a"][:S], params["rope_b"][:S],
        num_heads=num_heads, head_dim=head_dim, scaling=scaling)

    # 3) attention (flash / online-softmax unless weights are requested)
    mask = None
    if attention_mask is not None:
        # Module-parity path only; beware fully-masked rows (denominator -> 0).
        m = attention_mask.astype(jnp.float32)
        if m.ndim == 4:                  # [B, 1, Sq, Sk] -> [B, Sq, Sk]
            m = m[:, 0]
        mask = m[:, :S, :S]
    attn_heads, attn_w = pallas_attention(
        q_rot, k_rot, v_h, mask, causal=causal,
        output_attentions=output_attentions, tq=tq, tk=tk, head_group=head_group)

    # 4) output projection fused with the head merge (no HBM transpose)
    # TODO(synk): attention dropout (training=True) not implemented.
    out = pallas_head_merge_matmul(attn_heads, params["wo_t"], out_dtype=x.dtype)
    return out, attn_w


# ------------------------------- pure-JAX reference ------------------------------

def reference_forward(x, wqkv, wo, frequency_cis, attention_mask, num_heads, head_dim):
    """Pure-JAX reference: the module math with the same precision policy as the
    kernels (bf16 casts at the same points, f32 accumulation, f32 softmax)."""
    B, S, H = x.shape
    act, f32 = x.dtype, jnp.float32
    scaling = 1.0 / math.sqrt(head_dim)

    qkv = jnp.dot(x.astype(f32), wqkv.T.astype(f32)).astype(act)
    qkv = qkv.reshape(B, S, 3, num_heads, head_dim).transpose(2, 0, 3, 1, 4)
    q, k, v = qkv[0], qkv[1], qkv[2]

    fc = frequency_cis[:S].astype(f32).reshape(1, 1, S, head_dim // 2, 2, 2)

    def rope(t):
        t_ = t.astype(f32).reshape(B, num_heads, S, head_dim // 2, 1, 2)
        return (t_ * fc).sum(-1).reshape(B, num_heads, S, head_dim)

    qr = (rope(q) * scaling).astype(act)   # kernel folds 1/sqrt(hd) into q pre-cast
    kr = rope(k).astype(act)
    scores = jnp.einsum('bhqd,bhkd->bhqk', qr.astype(f32), kr.astype(f32))
    if attention_mask is not None:
        m = attention_mask.astype(f32)
        if m.ndim == 3:
            m = m[:, None]
        scores = scores + m[:, :, :S, :S]
    p = jax.nn.softmax(scores, axis=-1).astype(act)
    o = jnp.einsum('bhqk,bhkd->bhqd', p.astype(f32), v.astype(f32)).astype(act)
    o = o.transpose(0, 2, 1, 3).reshape(B, S, H)
    out = jnp.dot(o.astype(f32), wo.T.astype(f32)).astype(act)
    return out, p


# --------------------------------------- main ------------------------------------

if __name__ == "__main__":
    B, S = 2, 512
    num_heads, head_dim = 2, 128          # hidden_dim = num_heads * head_dim = 256
    H = num_heads * head_dim
    act_dtype = jnp.bfloat16

    key = jax.random.PRNGKey(0)
    kx, kq, ko = jax.random.split(key, 3)
    x = jax.random.normal(kx, (B, S, H), jnp.float32).astype(act_dtype)

    init_std = H ** (-0.5)
    wqkv = (init_std * jax.random.normal(kq, (3 * H, H), jnp.float32)).astype(act_dtype)
    wo = (init_std * jax.random.normal(ko, (H, H), jnp.float32)).astype(act_dtype)

    # rotary frequency_cis: [S, head_dim//2, 2, 2] with [[cos, -sin], [sin, cos]]
    pos = jnp.arange(S, dtype=jnp.float32)[:, None]
    inv_freq = 1.0 / (10000.0 ** (jnp.arange(0, head_dim, 2, dtype=jnp.float32) / head_dim))
    theta = pos * inv_freq[None, :]
    cos, sin = jnp.cos(theta), jnp.sin(theta)
    frequency_cis = jnp.stack(
        [jnp.stack([cos, -sin], axis=-1), jnp.stack([sin, cos], axis=-1)], axis=-2)

    # One-time (load-time) weight / table preparation.
    params = prepare_attention_params(wqkv, wo, frequency_cis,
                                      num_heads=num_heads, head_dim=head_dim)

    # additive causal mask used only by the pure-JAX reference
    causal_add = jnp.where(jnp.arange(S)[:, None] >= jnp.arange(S)[None, :],
                           0.0, MASK_VALUE)
    attention_mask = jnp.broadcast_to(causal_add, (B, S, S)).astype(jnp.float32)

    # 1) causal generated in-kernel, attention weights requested (full-key kernel)
    out1, w1 = attention_block_forward(x, params, None, causal=True,
                                       output_attentions=True)
    # 2) causal generated in-kernel, flash / KV-tiled path (module default)
    out2, w2 = attention_block_forward(x, params, None, causal=True,
                                       output_attentions=False)
    out1, w1, out2 = jax.block_until_ready((out1, w1, out2))

    ref_out, ref_w = reference_forward(
        x, wqkv, wo, frequency_cis, attention_mask, num_heads, head_dim)

    f = lambda t: np.asarray(t.astype(jnp.float32))
    np.testing.assert_allclose(f(out1), f(ref_out), rtol=2e-2, atol=2e-2)
    np.testing.assert_allclose(f(w1), f(ref_w), rtol=2e-2, atol=2e-2)
    np.testing.assert_allclose(f(out2), f(ref_out), rtol=2e-2, atol=2e-2)
    assert w2 is None

    # 3) non-causal / no-mask flash path (general path coverage)
    out3, _ = attention_block_forward(x, params, None, causal=False,
                                      output_attentions=False)
    out3 = jax.block_until_ready(out3)
    ref_out3, _ = reference_forward(
        x, wqkv, wo, frequency_cis, None, num_heads, head_dim)
    np.testing.assert_allclose(f(out3), f(ref_out3), rtol=2e-2, atol=2e-2)

    print("KERNEL_OK")
</pallas_src>

<mosaic_0001>
module attributes {stable_mosaic.version = 11 : i64} {
  func.func @_matmul_kernel_2d(%arg0: i32, %arg1: i32, %arg2: memref<256x256xbf16, #tpu.memory_space<vmem>>, %arg3: memref<256x256xbf16, #tpu.memory_space<vmem>>, %arg4: memref<256x256xbf16, #tpu.memory_space<vmem>>) attributes {dimension_semantics = [#tpu.dimension_semantics<parallel>, #tpu.dimension_semantics<parallel>], iteration_bounds = array<i64: 4, 3>, scalar_prefetch = 0 : i64, scratch_operands = 0 : i64, tpu.core_type = #tpu.core_type<tc>, window_params = [{transform_indices = @transform_0, window_bounds = array<i64: 256, 256>}, {transform_indices = @transform_1, window_bounds = array<i64: 256, 256>}, {transform_indices = @transform_2, window_bounds = array<i64: 256, 256>}]} {
    %c0 = arith.constant 0 : index
    %c0_0 = arith.constant 0 : index
    %0 = vector.load %arg2[%c0, %c0_0] : memref<256x256xbf16, #tpu.memory_space<vmem>>, vector<256x256xbf16>
    %c0_1 = arith.constant 0 : index
    %c0_2 = arith.constant 0 : index
    %1 = vector.load %arg3[%c0_1, %c0_2] : memref<256x256xbf16, #tpu.memory_space<vmem>>, vector<256x256xbf16>
    %cst = arith.constant dense<0.000000e+00> : vector<256x256xf32>
    %2 = tpu.matmul %0, %1, %cst {dimension_numbers = #tpu.dot_dimension_numbers<[1], [0], [0], [1], [0, 0, 1, 1], [], []>} : vector<256x256xbf16>, vector<256x256xbf16>, vector<256x256xf32> -> vector<256x256xf32>
    %3 = arith.truncf %2 : vector<256x256xf32> to vector<256x256xbf16>
    %c0_3 = arith.constant 0 : index
    %c0_4 = arith.constant 0 : index
    %4 = vector.load %arg4[%c0_3, %c0_4] : memref<256x256xbf16, #tpu.memory_space<vmem>>, vector<256x256xbf16>
    tpu.vector_store %arg4[%c0_3, %c0_4], %3 {strides = array<i32>} : memref<256x256xbf16, #tpu.memory_space<vmem>>, vector<256x256xbf16>,
    return
  }
  func.func @transform_0(%arg0: i32, %arg1: i32) -> (i32, i32) {
    %c0_i32 = arith.constant 0 : i32
    %c0_i32_0 = arith.constant 0 : i32
    return %arg0, %c0_i32 : i32, i32
  }
  func.func @transform_1(%arg0: i32, %arg1: i32) -> (i32, i32) {
    %c0_i32 = arith.constant 0 : i32
    %c0_i32_0 = arith.constant 0 : i32
    return %c0_i32, %arg1 : i32, i32
  }
  func.func @transform_2(%arg0: i32, %arg1: i32) -> (i32, i32) {
    %c0_i32 = arith.constant 0 : i32
    return %arg0, %arg1 : i32, i32
  }
}

</mosaic_0001>

<llo_original>
// kernel: tpu_custom_call.1
$region0: #{tpu_custom_call.1}
  #allocation0 [shape = 'u32[]', space=smem, size = 0x4, offset = 0x4, fixed_abs, tag = 'smem constant byte address 0x4 - core index']
  #allocation1 [shape = 'u32[72,128]{1,0:T(1,128)}', space=vmem, size = 0x9000, scoped, tag = 'internal scratch']
  %s0 = inlined_call_operand.hbm [shape: bf16[1024,256], index: 0, kind: input, shape index: {}]
  %s1 = inlined_call_operand.hbm [shape: bf16[256,768], index: 1, kind: input, shape index: {}]
  %s2 = inlined_call_operand.hbm [shape: bf16[1024,768], index: 2, kind: output, shape index: {}]
  %s3 = sld [smem:[#allocation0]]
  $region49: #{tpu_custom_call.1} parent=0
    _
  %s5 = ssub.s32 1, %s3
  %s6 = scalar_select 0, %s5, %s3
  $region1: #{tpu_custom_call.1} parent=0
    #allocation2 [shape = 'u8[262144]{0}', space=vmem, size = 0x40000, scoped, tag = 'input window, operand 0']
    #allocation3 [shape = 's32[2]{0}', space=sflag, size = 0x8, scoped, tag = 'scoped memory for tpu_custom_call.1']
    #allocation4 [shape = 's32[2]{0}', space=sflag, size = 0x8, scoped, tag = 'scoped memory for tpu_custom_call.1']
    #allocation5 [shape = 'u8[262144]{0}', space=vmem, size = 0x40000, scoped, tag = 'input window, operand 1']
    #allocation6 [shape = 's32[2]{0}', space=sflag, size = 0x8, scoped, tag = 'scoped memory for tpu_custom_call.1']
    #allocation7 [shape = 'u8[262144]{0}', space=vmem, size = 0x40000, scoped, tag = 'output window, operand 0']
    %7 = vsyncpa [#allocation3], 0
    %s8 = scalar_lea.sflag [#allocation3], 1
    %9 = vsyncpa %s8, 0
    %10 = vsyncpa [#allocation6], 0
    %s11 = scalar_lea.sflag [#allocation6], 1
    %12 = vsyncpa %s11, 0
    %13 = vsyncpa [#allocation4], 0
    %s14 = scalar_lea.sflag [#allocation4], 1
    %15 = vsyncpa %s14, 0
    loop: start=0, step=1, limit=14
    $region2: #{tpu_custom_call.1} parent=1 // loop_pre_header
      _
    $region3: #{tpu_custom_call.1} parent=1 // loop_header
      %s17 = sphi 0, %s21
      %p18 = scmp.ge.s32.totalorder %s17, 14
      %s24 = sphi 0, %s36
      %s25 = sphi 0, %s32
      %s26 = sphi 0, %s24
      %s27 = sphi 0, %s25
      %s28 = sphi 0, %s26
      %s29 = sphi 0, %s27
      %s39 = sphi 0, %s41
      %s42 = sphi 0, %s39
      %s43 = sphi 0, %s42
      %s59 = sphi 0, %s43
      %s65 = sphi 0, %s67
      %s68 = sphi 0, %s65
      %s69 = sphi 0, %s68
      %s85 = sphi 0, %s69
      %s93 = sphi 0, %s95
      %s96 = sphi 0, %s93
      %s97 = sphi 0, %s96
      %s113 = sphi 0, %s97
    $region4: #{tpu_custom_call.1} parent=1 // loop_header_branch
      %20 = sbr.rel (%p18) target = $region8
    $region5: #{tpu_custom_call.1} parent=1 // loop_body
      %s22 = ssub.s32 %s17, 1
      %s23 = ssub.s32 %s17, 2
      %s30 = sadd.s32 1, %s25
      %p31 = scmp.ge.s32.totalorder %s30, 3
      %s32 = scalar_select %p31, 0, %s30
      %s33 = sadd.s32 1, %s24
      %s34 = scalar_select %p31, %s33, %s24
      %p35 = scmp.ge.s32.totalorder %s34, 4
      %s36 = scalar_select %p35, 0, %s34
      %s37 = ssub.s32 %s24, %s36
      %p38 = scmp.eq.s32.totalorder %s37, 0
      %s40 = sadd.s32 %s39, 1
      %s41 = scalar_select %p38, %s39, %s40
      %p44 = pneg %p38
      %p45 = scmp.eq.s32.totalorder %s17, 11
      %p46 = por %p44, %p45
      %p47 = scmp.ne.s32.totalorder %s39, %s42
      %p48 = scmp.eq.s32.totalorder %s17, 0
      %p49 = por %p47, %p48
      %p50 = scmp.ne.s32.totalorder %s39, %s42
      %p51 = scmp.eq.s32.totalorder %s22, 11
      %p52 = por %p50, %p51
      %p53 = scmp.ne.s32.totalorder %s42, %s43
      %p54 = scmp.eq.s32.totalorder %s22, 0
      %p55 = por %p53, %p54
      %p56 = scmp.ne.s32.totalorder %s42, %s43
      %p57 = scmp.eq.s32.totalorder %s23, 11
      %p58 = por %p56, %p57
      %p60 = scmp.ne.s32.totalorder %s43, %s59
      %p61 = scmp.eq.s32.totalorder %s23, 0
      %p62 = por %p60, %p61
      %s63 = ssub.s32 %s25, %s32
      %p64 = scmp.eq.s32.totalorder %s63, 0
      %s66 = sadd.s32 %s65, 1
      %s67 = scalar_select %p64, %s65, %s66
      %p70 = pneg %p64
      %p71 = scmp.eq.s32.totalorder %s17, 11
      %p72 = por %p70, %p71
      %p73 = scmp.ne.s32.totalorder %s65, %s68
      %p74 = scmp.eq.s32.totalorder %s17, 0
      %p75 = por %p73, %p74
      %p76 = scmp.ne.s32.totalorder %s65, %s68
      %p77 = scmp.eq.s32.totalorder %s22, 11
      %p78 = por %p76, %p77
      %p79 = scmp.ne.s32.totalorder %s68, %s69
      %p80 = scmp.eq.s32.totalorder %s22, 0
      %p81 = por %p79, %p80
      %p82 = scmp.ne.s32.totalorder %s68, %s69
      %p83 = scmp.eq.s32.totalorder %s23, 11
      %p84 = por %p82, %p83
      %p86 = scmp.ne.s32.totalorder %s69, %s85
      %p87 = scmp.eq.s32.totalorder %s23, 0
      %p88 = por %p86, %p87
      %s89 = ssub.s32 %s24, %s36
      %s90 = ssub.s32 %s25, %s32
      %s91 = sor.u32 %s89, %s90
      %p92 = scmp.eq.s32.totalorder %s91, 0
      %s94 = sadd.s32 %s93, 1
      %s95 = scalar_select %p92, %s93, %s94
      %p98 = pneg %p92
      %p99 = scmp.eq.s32.totalorder %s17, 11
      %p100 = por %p98, %p99
      %p101 = scmp.ne.s32.totalorder %s93, %s96
      %p102 = scmp.eq.s32.totalorder %s17, 0
      %p103 = por %p101, %p102
      %p104 = scmp.ne.s32.totalorder %s93, %s96
      %p105 = scmp.eq.s32.totalorder %s22, 11
      %p106 = por %p104, %p105
      %p107 = scmp.ne.s32.totalorder %s96, %s97
      %p108 = scmp.eq.s32.totalorder %s22, 0
      %p109 = por %p107, %p108
      %p110 = scmp.ne.s32.totalorder %s96, %s97
      %p111 = scmp.eq.s32.totalorder %s23, 11
      %p112 = por %p110, %p111
      %p114 = scmp.ne.s32.totalorder %s97, %s113
      %p115 = scmp.eq.s32.totalorder %s23, 0
      %p116 = por %p114, %p115
      %p117 = scmp.le.s32.totalorder 1, %s17
      %p118 = scmp.lt.s32.totalorder %s17, 13
      %p119 = pnand %p117, %p118
      %p120 = pneg %p119
      // Predicated region
      $region9: #{tpu_custom_call.1} parent=5 // pred_check
        _
      $region10: #{tpu_custom_call.1} parent=5 // pred_check_branch
        %122 = sbr.rel (%p119) target = $region12
      $region11: #{tpu_custom_call.1} parent=5 // pred_region
        %s123 = ssub.s32 %s17, 1
      $region12: #{tpu_custom_call.1} parent=5 // pred_fallthru
        _
      %p124 = scmp.lt.s32.totalorder %s17, 12
      // Predicated region
      $region13: #{tpu_custom_call.1} parent=5 // pred_check
        %p125 = pneg %p124
      $region14: #{tpu_custom_call.1} parent=5 // pred_check_branch
        %127 = sbr.rel (%p125) target = $region16
      $region15: #{tpu_custom_call.1} parent=5 // pred_region
        // Predicated region
        $region17: #{tpu_custom_call.1} parent=15 // pred_check
          %p128 = pneg %p49
        $region18: #{tpu_custom_call.1} parent=15 // pred_check_branch
          %130 = sbr.rel (%p128) target = $region20
        $region19: #{tpu_custom_call.1} parent=15 // pred_region
          %s131 = sand.u32 %s39, 1
          %s132 = scalar_lea.sflag [#allocation3], %s131
          %s133 = sand.u32 %s39, 1
          %s134 = smul.addr %s133, 256
          %s135 = scalar_lea.vmem [#allocation2], %s134
          %s136 = smul.u32 32, %s24
          %138 = vsyncadd %s132, 0
          %s139 = smul.addr %s136, 2
          %s140 = smul.addr %s139, 4
          %s141 = scalar_lea.hbm %s0, %s140
          %s142 = sshll.u32 %s141, 4
          %s143 = int_to_ptr.hbm [resolvable:$true] %s142
          %s144 = sshll.u32 %s135, 4
          %s145 = int_to_ptr.vmem [resolvable:$true] %s144
          %150 = dma.hbm_to_vmem [thread:$0]  %s143, 4096, %s145, %s132, 128, 128, 8
        $region20: #{tpu_custom_call.1} parent=15 // pred_fallthru
          _
        // Predicated region
        $region21: #{tpu_custom_call.1} parent=15 // pred_check
          %p151 = pneg %p75
        $region22: #{tpu_custom_call.1} parent=15 // pred_check_branch
          %153 = sbr.rel (%p151) target = $region24
        $region23: #{tpu_custom_call.1} parent=15 // pred_region
          %s154 = sand.u32 %s65, 1
          %s155 = scalar_lea.sflag [#allocation6], %s154
          %s156 = sand.u32 %s65, 1
          %s157 = smul.addr %s156, 256
          %s158 = scalar_lea.vmem [#allocation5], %s157
          %s159 = smul.u32 2, %s25
          %161 = vsyncadd %s155, 0
          %s162 = smul.addr %s159, 4
          %s163 = scalar_lea.hbm %s1, %s162
          %s164 = sshll.u32 %s163, 4
          %s165 = int_to_ptr.hbm [resolvable:$true] %s164
          %s166 = sshll.u32 %s158, 4
          %s167 = int_to_ptr.vmem [resolvable:$true] %s166
          %172 = dma.hbm_to_vmem [thread:$0]  %s165, 4096, %s167, %s155, 384, 128, 8
        $region24: #{tpu_custom_call.1} parent=15 // pred_fallthru
          _
      $region16: #{tpu_custom_call.1} parent=5 // pred_fallthru
        _
      %p173 = scmp.le.s32.totalorder 1, %s17
      %p174 = scmp.lt.s32.totalorder %s17, 13
      %p175 = pnand %p173, %p174
      %p176 = pneg %p175
      // Predicated region
      $region25: #{tpu_custom_call.1} parent=5 // pred_check
        _
      $region26: #{tpu_custom_call.1} parent=5 // pred_check_branch
        %178 = sbr.rel (%p175) target = $region28
      $region27: #{tpu_custom_call.1} parent=5 // pred_region
        %s179 = ssub.s32 %s17, 1
        %s180 = sand.u32 %s42, 1
        %s181 = scalar_lea.sflag [#allocation3], %s180
        %s182 = sand.u32 %s42, 1
        %s183 = smul.addr %s182, 256
        %s184 = scalar_lea.vmem [#allocation2], %s183
        // Predicated region
        $region29: #{tpu_custom_call.1} parent=27 // pred_check
          %p185 = pneg %p55
        $region30: #{tpu_custom_call.1} parent=27 // pred_check_branch
          %187 = sbr.rel (%p185) target = $region32
        $region31: #{tpu_custom_call.1} parent=27 // pred_region
          %189 = dma.done %s181, 4096
        $region32: #{tpu_custom_call.1} parent=27 // pred_fallthru
          _
        %s190 = sand.u32 %s68, 1
        %s191 = scalar_lea.sflag [#allocation6], %s190
        %s192 = sand.u32 %s68, 1
        %s193 = smul.addr %s192, 256
        %s194 = scalar_lea.vmem [#allocation5], %s193
        // Predicated region
        $region33: #{tpu_custom_call.1} parent=27 // pred_check
          %p195 = pneg %p81
        $region34: #{tpu_custom_call.1} parent=27 // pred_check_branch
          %197 = sbr.rel (%p195) target = $region36
        $region35: #{tpu_custom_call.1} parent=27 // pred_region
          %199 = dma.done %s191, 4096
        $region36: #{tpu_custom_call.1} parent=27 // pred_fallthru
          _
        %s200 = sand.u32 %s42, 1
        %s201 = scalar_lea.sflag [#allocation3], %s200
        %s202 = sand.u32 %s42, 1
        %s203 = smul.addr %s202, 256
        %s204 = scalar_lea.vmem [#allocation2], %s203
        %p205 = pneg %p55
        %p206 = pneg %p52
        %s207 = sand.u32 %s68, 1
        %s208 = scalar_lea.sflag [#allocation6], %s207
        %s209 = sand.u32 %s68, 1
        %s210 = smul.addr %s209, 256
        %s211 = scalar_lea.vmem [#allocation5], %s210
        %p212 = pneg %p81
        %p213 = pneg %p78
        %p214 = pneg %p109
        %p215 = pneg %p106
        %s216 = sand.u32 %s96, 1
        %s217 = scalar_lea.sflag [#allocation4], %s216
        %s218 = sand.u32 %s96, 1
        %s219 = smul.addr %s218, 256
        %s220 = scalar_lea.vmem [#allocation7], %s219
        %s221 = smul.u32 32, %s26
        %s222 = smul.u32 2, %s27
        %s223 = smul.u32 32, %s26
        %s224 = smul.u32 2, %s27
        %v225 = vld [vmem:[%s184] sm:$0xff]
        %v226 = vld [vmem:[%s184 + $0x8] sm:$0xff]
        %v227 = vld [vmem:[%s184 + $0x10] sm:$0xff]
        %v228 = vld [vmem:[%s184 + $0x18] sm:$0xff]
        %v229 = vld [vmem:[%s184 + $0x20] sm:$0xff]
        %v230 = vld [vmem:[%s184 + $0x28] sm:$0xff]
        %v231 = vld [vmem:[%s184 + $0x30] sm:$0xff]
        %v232 = vld [vmem:[%s184 + $0x38] sm:$0xff]
        %v233 = vld [vmem:[%s184 + $0x40] sm:$0xff]
        %v234 = vld [vmem:[%s184 + $0x48] sm:$0xff]
        %v235 = vld [vmem:[%s184 + $0x50] sm:$0xff]
        %v236 = vld [vmem:[%s184 + $0x58] sm:$0xff]
        %v237 = vld [vmem:[%s184 + $0x60] sm:$0xff]
        %v238 = vld [vmem:[%s184 + $0x68] sm:$0xff]
        %v239 = vld [vmem:[%s184 + $0x70] sm:$0xff]
        %v240 = vld [vmem:[%s184 + $0x78] sm:$0xff]
        %v241 = vld [vmem:[%s184 + $0x80] sm:$0xff]
        %v242 = vld [vmem:[%s184 + $0x88] sm:$0xff]
        %v243 = vld [vmem:[%s184 + $0x90] sm:$0xff]
        %v244 = vld [vmem:[%s184 + $0x98] sm:$0xff]
        %v245 = vld [vmem:[%s184 + $0xa0] sm:$0xff]
        %v246 = vld [vmem:[%s184 + $0xa8] sm:$0xff]
        %v247 = vld [vmem:[%s184 + $0xb0] sm:$0xff]
        %v248 = vld [vmem:[%s184 + $0xb8] sm:$0xff]
        %v249 = vld [vmem:[%s184 + $0xc0] sm:$0xff]
        %v250 = vld [vmem:[%s184 + $0xc8] sm:$0xff]
        %v251 = vld [vmem:[%s184 + $0xd0] sm:$0xff]
        %v252 = vld [vmem:[%s184 + $0xd8] sm:$0xff]
        %v253 = vld [vmem:[%s184 + $0xe0] sm:$0xff]
        %v254 = vld [vmem:[%s184 + $0xe8] sm:$0xff]
        %v255 = vld [vmem:[%s184 + $0xf0] sm:$0xff]
        %v256 = vld [vmem:[%s184 + $0xf8] sm:$0xff]
        %v257 = vld [vmem:[%s194] sm:$0xff]
        %v258 = vld [vmem:[%s194 + $0x8] sm:$0xff]
        %v259 = vld [vmem:[%s194 + $0x10] sm:$0xff]
        %v260 = vld [vmem:[%s194 + $0x18] sm:$0xff]
        %v261 = vld [vmem:[%s194 + $0x20] sm:$0xff]
        %v262 = vld [vmem:[%s194 + $0x28] sm:$0xff]
        %v263 = vld [vmem:[%s194 + $0x30] sm:$0xff]
        %v264 = vld [vmem:[%s194 + $0x38] sm:$0xff]
        %v265 = vld [vmem:[%s194 + $0x40] sm:$0xff]
        %v266 = vld [vmem:[%s194 + $0x48] sm:$0xff]
        %v267 = vld [vmem:[%s194 + $0x50] sm:$0xff]
        %v268 = vld [vmem:[%s194 + $0x58] sm:$0xff]
        %v269 = vld [vmem:[%s194 + $0x60] sm:$0xff]
        %v270 = vld [vmem:[%s194 + $0x68] sm:$0xff]
        %v271 = vld [vmem:[%s194 + $0x70] sm:$0xff]
        %v272 = vld [vmem:[%s194 + $0x78] sm:$0xff]
        %v273 = vld [vmem:[%s194 + $0x80] sm:$0xff]
        %v274 = vld [vmem:[%s194 + $0x88] sm:$0xff]
        %v275 = vld [vmem:[%s194 + $0x90] sm:$0xff]
        %v276 = vld [vmem:[%s194 + $0x98] sm:$0xff]
        %v277 = vld [vmem:[%s194 + $0xa0] sm:$0xff]
        %v278 = vld [vmem:[%s194 + $0xa8] sm:$0xff]
        %v279 = vld [vmem:[%s194 + $0xb0] sm:$0xff]
        %v280 = vld [vmem:[%s194 + $0xb8] sm:$0xff]
        %v281 = vld [vmem:[%s194 + $0xc0] sm:$0xff]
        %v282 = vld [vmem:[%s194 + $0xc8] sm:$0xff]
        %v283 = vld [vmem:[%s194 + $0xd0] sm:$0xff]
        %v284 = vld [vmem:[%s194 + $0xd8] sm:$0xff]
        %v285 = vld [vmem:[%s194 + $0xe0] sm:$0xff]
        %v286 = vld [vmem:[%s194 + $0xe8] sm:$0xff]
        %v287 = vld [vmem:[%s194 + $0xf0] sm:$0xff]
        %v288 = vld [vmem:[%s194 + $0xf8] sm:$0xff]
        %v321 = vunpack.c.l.b16 %v225
        %v322 = vunpack.c.h.b16 %v225
        %v323 = vunpack.c.l.b16 %v226
        %v324 = vunpack.c.h.b16 %v226
        %v325 = vunpack.c.l.b16 %v227
        %v326 = vunpack.c.h.b16 %v227
        %v327 = vunpack.c.l.b16 %v228
        %v328 = vunpack.c.h.b16 %v228
        %v329 = vunpack.c.l.b16 %v229
        %v330 = vunpack.c.h.b16 %v229
        %v331 = vunpack.c.l.b16 %v230
        %v332 = vunpack.c.h.b16 %v230
        %v333 = vunpack.c.l.b16 %v231
        %v334 = vunpack.c.h.b16 %v231
        %v335 = vunpack.c.l.b16 %v232
        %v336 = vunpack.c.h.b16 %v232
        %v337 = vunpack.c.l.b16 %v233
        %v338 = vunpack.c.h.b16 %v233
        %v339 = vunpack.c.l.b16 %v234
        %v340 = vunpack.c.h.b16 %v234
        %v341 = vunpack.c.l.b16 %v235
        %v342 = vunpack.c.h.b16 %v235
        %v343 = vunpack.c.l.b16 %v236
        %v344 = vunpack.c.h.b16 %v236
        %v345 = vunpack.c.l.b16 %v237
        %v346 = vunpack.c.h.b16 %v237
        %v347 = vunpack.c.l.b16 %v238
        %v348 = vunpack.c.h.b16 %v238
        %v349 = vunpack.c.l.b16 %v239
        %v350 = vunpack.c.h.b16 %v239
        %v351 = vunpack.c.l.b16 %v240
        %v352 = vunpack.c.h.b16 %v240
        %v353 = vunpack.c.l.b16 %v241
        %v354 = vunpack.c.h.b16 %v241
        %v355 = vunpack.c.l.b16 %v242
        %v356 = vunpack.c.h.b16 %v242
        %v357 = vunpack.c.l.b16 %v243
        %v358 = vunpack.c.h.b16 %v243
        %v359 = vunpack.c.l.b16 %v244
        %v360 = vunpack.c.h.b16 %v244
        %v361 = vunpack.c.l.b16 %v245
        %v362 = vunpack.c.h.b16 %v245
        %v363 = vunpack.c.l.b16 %v246
        %v364 = vunpack.c.h.b16 %v246
        %v365 = vunpack.c.l.b16 %v247
        %v366 = vunpack.c.h.b16 %v247
        %v367 = vunpack.c.l.b16 %v248
        %v368 = vunpack.c.h.b16 %v248
        %v369 = vunpack.c.l.b16 %v249
        %v370 = vunpack.c.h.b16 %v249
        %v371 = vunpack.c.l.b16 %v250
        %v372 = vunpack.c.h.b16 %v250
        %v373 = vunpack.c.l.b16 %v251
        %v374 = vunpack.c.h.b16 %v251
        %v375 = vunpack.c.l.b16 %v252
        %v376 = vunpack.c.h.b16 %v252
        %v377 = vunpack.c.l.b16 %v253
        %v378 = vunpack.c.h.b16 %v253
        %v379 = vunpack.c.l.b16 %v254
        %v380 = vunpack.c.h.b16 %v254
        %v381 = vunpack.c.l.b16 %v255
        %v382 = vunpack.c.h.b16 %v255
        %v383 = vunpack.c.l.b16 %v256
        %v384 = vunpack.c.h.b16 %v256
        %v385 = vpack.c.b16 %v323, %v321
        %v386 = vpack.c.b16 %v324, %v322
        %v387 = vpack.c.b16 %v327, %v325
        %v388 = vpack.c.b16 %v328, %v326
        %v389 = vpack.c.b16 %v331, %v329
        %v390 = vpack.c.b16 %v332, %v330
        %v391 = vpack.c.b16 %v335, %v333
        %v392 = vpack.c.b16 %v336, %v334
        %v393 = vpack.c.b16 %v339, %v337
        %v394 = vpack.c.b16 %v340, %v338
        %v395 = vpack.c.b16 %v343, %v341
        %v396 = vpack.c.b16 %v344, %v342
        %v397 = vpack.c.b16 %v347, %v345
        %v398 = vpack.c.b16 %v348, %v346
        %v399 = vpack.c.b16 %v351, %v349
        %v400 = vpack.c.b16 %v352, %v350
        %v401 = vpack.c.b16 %v355, %v353
        %v402 = vpack.c.b16 %v356, %v354
        %v403 = vpack.c.b16 %v359, %v357
        %v404 = vpack.c.b16 %v360, %v358
        %v405 = vpack.c.b16 %v363, %v361
        %v406 = vpack.c.b16 %v364, %v362
        %v407 = vpack.c.b16 %v367, %v365
        %v408 = vpack.c.b16 %v368, %v366
        %v409 = vpack.c.b16 %v371, %v369
        %v410 = vpack.c.b16 %v372, %v370
        %v411 = vpack.c.b16 %v375, %v373
        %v412 = vpack.c.b16 %v376, %v374
        %v413 = vpack.c.b16 %v379, %v377
        %v414 = vpack.c.b16 %v380, %v378
        %v415 = vpack.c.b16 %v383, %v381
        %v416 = vpack.c.b16 %v384, %v382
        %v481 = vunpack.c.l.b16 %v257
        %v482 = vunpack.c.h.b16 %v257
        %v483 = vunpack.c.l.b16 %v258
        %v484 = vunpack.c.h.b16 %v258
        %v485 = vunpack.c.l.b16 %v259
        %v486 = vunpack.c.h.b16 %v259
        %v487 = vunpack.c.l.b16 %v260
        %v488 = vunpack.c.h.b16 %v260
        %v489 = vunpack.c.l.b16 %v261
        %v490 = vunpack.c.h.b16 %v261
        %v491 = vunpack.c.l.b16 %v262
        %v492 = vunpack.c.h.b16 %v262
        %v493 = vunpack.c.l.b16 %v263
        %v494 = vunpack.c.h.b16 %v263
        %v495 = vunpack.c.l.b16 %v264
        %v496 = vunpack.c.h.b16 %v264
        %v497 = vunpack.c.l.b16 %v265
        %v498 = vunpack.c.h.b16 %v265
        %v499 = vunpack.c.l.b16 %v266
        %v500 = vunpack.c.h.b16 %v266
        %v501 = vunpack.c.l.b16 %v267
        %v502 = vunpack.c.h.b16 %v267
        %v503 = vunpack.c.l.b16 %v268
        %v504 = vunpack.c.h.b16 %v268
        %v505 = vunpack.c.l.b16 %v269
        %v506 = vunpack.c.h.b16 %v269
        %v507 = vunpack.c.l.b16 %v270
        %v508 = vunpack.c.h.b16 %v270
        %v509 = vunpack.c.l.b16 %v271
        %v510 = vunpack.c.h.b16 %v271
        %v511 = vunpack.c.l.b16 %v272
        %v512 = vunpack.c.h.b16 %v272
        %v513 = vunpack.c.l.b16 %v273
        %v514 = vunpack.c.h.b16 %v273
        %v515 = vunpack.c.l.b16 %v274
        %v516 = vunpack.c.h.b16 %v274
        %v517 = vunpack.c.l.b16 %v275
        %v518 = vunpack.c.h.b16 %v275
        %v519 = vunpack.c.l.b16 %v276
        %v520 = vunpack.c.h.b16 %v276
        %v521 = vunpack.c.l.b16 %v277
        %v522 = vunpack.c.h.b16 %v277
        %v523 = vunpack.c.l.b16 %v278
        %v524 = vunpack.c.h.b16 %v278
        %v525 = vunpack.c.l.b16 %v279
        %v526 = vunpack.c.h.b16 %v279
        %v527 = vunpack.c.l.b16 %v280
        %v528 = vunpack.c.h.b16 %v280
        %v529 = vunpack.c.l.b16 %v281
        %v530 = vunpack.c.h.b16 %v281
        %v531 = vunpack.c.l.b16 %v282
        %v532 = vunpack.c.h.b16 %v282
        %v533 = vunpack.c.l.b16 %v283
        %v534 = vunpack.c.h.b16 %v283
        %v535 = vunpack.c.l.b16 %v284
        %v536 = vunpack.c.h.b16 %v284
        %v537 = vunpack.c.l.b16 %v285
        %v538 = vunpack.c.h.b16 %v285
        %v539 = vunpack.c.l.b16 %v286
        %v540 = vunpack.c.h.b16 %v286
        %v541 = vunpack.c.l.b16 %v287
        %v542 = vunpack.c.h.b16 %v287
        %v543 = vunpack.c.l.b16 %v288
        %v544 = vunpack.c.h.b16 %v288
        %v545 = vpack.c.b16 %v483, %v481
        %v546 = vpack.c.b16 %v484, %v482
        %v547 = vpack.c.b16 %v487, %v485
        %v548 = vpack.c.b16 %v488, %v486
        %v549 = vpack.c.b16 %v491, %v489
        %v550 = vpack.c.b16 %v492, %v490
        %v551 = vpack.c.b16 %v495, %v493
        %v552 = vpack.c.b16 %v496, %v494
        %v553 = vpack.c.b16 %v499, %v497
        %v554 = vpack.c.b16 %v500, %v498
        %v555 = vpack.c.b16 %v503, %v501
        %v556 = vpack.c.b16 %v504, %v502
        %v557 = vpack.c.b16 %v507, %v505
        %v558 = vpack.c.b16 %v508, %v506
        %v559 = vpack.c.b16 %v511, %v509
        %v560 = vpack.c.b16 %v512, %v510
        %v561 = vpack.c.b16 %v515, %v513
        %v562 = vpack.c.b16 %v516, %v514
        %v563 = vpack.c.b16 %v519, %v517
        %v564 = vpack.c.b16 %v520, %v518
        %v565 = vpack.c.b16 %v523, %v521
        %v566 = vpack.c.b16 %v524, %v522
        %v567 = vpack.c.b16 %v527, %v525
        %v568 = vpack.c.b16 %v528, %v526
        %v569 = vpack.c.b16 %v531, %v529
        %v570 = vpack.c.b16 %v532, %v530
        %v571 = vpack.c.b16 %v535, %v533
        %v572 = vpack.c.b16 %v536, %v534
        %v573 = vpack.c.b16 %v539, %v537
        %v574 = vpack.c.b16 %v540, %v538
        %v575 = vpack.c.b16 %v543, %v541
        %v576 = vpack.c.b16 %v544, %v542
        %609 = vmatpush.bf16.msra.mxu0 %v559
        %610 = vmatpush.bf16.msra.mxu0 %v557
        %611 = vmatpush.bf16.msra.mxu0 %v555
        %612 = vmatpush.bf16.msra.mxu0 %v553
        %613 = vmatpush.bf16.msra.mxu0 %v551
        %614 = vmatpush.bf16.msra.mxu0 %v549
        %615 = vmatpush.bf16.msra.mxu0 %v547
        %616 = vmatpush.bf16.msra.mxu0 %v545
        %617 = vmatmul.bf16.gmra.mxu0 %v385
        %v618 = vpop.f32.mrf.mxu0
        %v619 = vadd.f32 0.0, %v618
        %v620 = vpop.f32.mrf.mxu0
        %v621 = vadd.f32 0.0, %v620
        %622 = vmatmul.bf16.gmra.mxu0 %v387
        %v623 = vpop.f32.mrf.mxu0
        %v624 = vadd.f32 0.0, %v623
        %v625 = vpop.f32.mrf.mxu0
        %v626 = vadd.f32 0.0, %v625
        %627 = vmatmul.bf16.gmra.mxu0 %v389
        %v628 = vpop.f32.mrf.mxu0
        %v629 = vadd.f32 0.0, %v628
        %v630 = vpop.f32.mrf.mxu0
        %v631 = vadd.f32 0.0, %v630
        %632 = vmatmul.bf16.gmra.mxu0 %v391
        %v633 = vpop.f32.mrf.mxu0
        %v634 = vadd.f32 0.0, %v633
        %v635 = vpop.f32.mrf.mxu0
        %v636 = vadd.f32 0.0, %v635
        %637 = vmatmul.bf16.gmra.mxu0 %v393
        %v638 = vpop.f32.mrf.mxu0
        %v639 = vadd.f32 0.0, %v638
        %v640 = vpop.f32.mrf.mxu0
        %v641 = vadd.f32 0.0, %v640
        %642 = vmatmul.bf16.gmra.mxu0 %v395
        %v643 = vpop.f32.mrf.mxu0
        %v644 = vadd.f32 0.0, %v643
        %v645 = vpop.f32.mrf.mxu0
        %v646 = vadd.f32 0.0, %v645
        %647 = vmatmul.bf16.gmra.mxu0 %v397
        %v648 = vpop.f32.mrf.mxu0
        %v649 = vadd.f32 0.0, %v648
        %v650 = vpop.f32.mrf.mxu0
        %v651 = vadd.f32 0.0, %v650
        %652 = vmatmul.bf16.gmra.mxu0 %v399
        %v653 = vpop.f32.mrf.mxu0
        %v654 = vadd.f32 0.0, %v653
        %v655 = vpop.f32.mrf.mxu0
        %v656 = vadd.f32 0.0, %v655
        %657 = vmatmul.bf16.gmra.mxu0 %v401
        %v658 = vpop.f32.mrf.mxu0
        %v659 = vadd.f32 0.0, %v658
        %v660 = vpop.f32.mrf.mxu0
        %v661 = vadd.f32 0.0, %v660
        %662 = vmatmul.bf16.gmra.mxu0 %v403
        %v663 = vpop.f32.mrf.mxu0
        %v664 = vadd.f32 0.0, %v663
        %v665 = vpop.f32.mrf.mxu0
        %v666 = vadd.f32 0.0, %v665
        %667 = vmatmul.bf16.gmra.mxu0 %v405
        %v668 = vpop.f32.mrf.mxu0
        %v669 = vadd.f32 0.0, %v668
        %v670 = vpop.f32.mrf.mxu0
        %v671 = vadd.f32 0.0, %v670
        %672 = vmatmul.bf16.gmra.mxu0 %v407
        %v673 = vpop.f32.mrf.mxu0
        %v674 = vadd.f32 0.0, %v673
        %v675 = vpop.f32.mrf.mxu0
        %v676 = vadd.f32 0.0, %v675
        %677 = vmatmul.bf16.gmra.mxu0 %v409
        %v678 = vpop.f32.mrf.mxu0
        %v679 = vadd.f32 0.0, %v678
        %v680 = vpop.f32.mrf.mxu0
        %v681 = vadd.f32 0.0, %v680
        %682 = vmatmul.bf16.gmra.mxu0 %v411
        %v683 = vpop.f32.mrf.mxu0
        %v684 = vadd.f32 0.0, %v683
        %v685 = vpop.f32.mrf.mxu0
        %v686 = vadd.f32 0.0, %v685
        %687 = vmatmul.bf16.gmra.mxu0 %v413
        %v688 = vpop.f32.mrf.mxu0
        %v689 = vadd.f32 0.0, %v688
        %v690 = vpop.f32.mrf.mxu0
        %v691 = vadd.f32 0.0, %v690
        %692 = vmatmul.bf16.gmra.mxu0 %v415
        %v693 = vpop.f32.mrf.mxu0
        %v694 = vadd.f32 0.0, %v693
        %v695 = vpop.f32.mrf.mxu0
        %v696 = vadd.f32 0.0, %v695
        %697 = vdwg.mxu0
        %698 = vmatpush.bf16.msra.mxu0 %v575
        %699 = vmatpush.bf16.msra.mxu0 %v573
        %700 = vmatpush.bf16.msra.mxu0 %v571
        %701 = vmatpush.bf16.msra.mxu0 %v569
        %702 = vmatpush.bf16.msra.mxu0 %v567
        %703 = vmatpush.bf16.msra.mxu0 %v565
        %704 = vmatpush.bf16.msra.mxu0 %v563
        %705 = vmatpush.bf16.msra.mxu0 %v561
        %706 = vmatmul.bf16.gmra.mxu0 %v386
        %v707 = vpop.f32.mrf.mxu0
        %v708 = vadd.f32 %v619, %v707
        %v709 = vpop.f32.mrf.mxu0
        %v710 = vadd.f32 %v621, %v709
        %711 = vmatmul.bf16.gmra.mxu0 %v388
        %v712 = vpop.f32.mrf.mxu0
        %v713 = vadd.f32 %v624, %v712
        %v714 = vpop.f32.mrf.mxu0
        %v715 = vadd.f32 %v626, %v714
        %716 = vmatmul.bf16.gmra.mxu0 %v390
        %v717 = vpop.f32.mrf.mxu0
        %v718 = vadd.f32 %v629, %v717
        %v719 = vpop.f32.mrf.mxu0
        %v720 = vadd.f32 %v631, %v719
        %721 = vmatmul.bf16.gmra.mxu0 %v392
        %v722 = vpop.f32.mrf.mxu0
        %v723 = vadd.f32 %v634, %v722
        %v724 = vpop.f32.mrf.mxu0
        %v725 = vadd.f32 %v636, %v724
        %726 = vmatmul.bf16.gmra.mxu0 %v394
        %v727 = vpop.f32.mrf.mxu0
        %v728 = vadd.f32 %v639, %v727
        %v729 = vpop.f32.mrf.mxu0
        %v730 = vadd.f32 %v641, %v729
        %731 = vmatmul.bf16.gmra.mxu0 %v396
        %v732 = vpop.f32.mrf.mxu0
        %v733 = vadd.f32 %v644, %v732
        %v734 = vpop.f32.mrf.mxu0
        %v735 = vadd.f32 %v646, %v734
        %736 = vmatmul.bf16.gmra.mxu0 %v398
        %v737 = vpop.f32.mrf.mxu0
        %v738 = vadd.f32 %v649, %v737
        %v739 = vpop.f32.mrf.mxu0
        %v740 = vadd.f32 %v651, %v739
        %741 = vmatmul.bf16.gmra.mxu0 %v400
        %v742 = vpop.f32.mrf.mxu0
        %v743 = vadd.f32 %v654, %v742
        %v744 = vpop.f32.mrf.mxu0
        %v745 = vadd.f32 %v656, %v744
        %746 = vmatmul.bf16.gmra.mxu0 %v402
        %v747 = vpop.f32.mrf.mxu0
        %v748 = vadd.f32 %v659, %v747
        %v749 = vpop.f32.mrf.mxu0
        %v750 = vadd.f32 %v661, %v749
        %751 = vmatmul.bf16.gmra.mxu0 %v404
        %v752 = vpop.f32.mrf.mxu0
        %v753 = vadd.f32 %v664, %v752
        %v754 = vpop.f32.mrf.mxu0
        %v755 = vadd.f32 %v666, %v754
        %756 = vmatmul.bf16.gmra.mxu0 %v406
        %v757 = vpop.f32.mrf.mxu0
        %v758 = vadd.f32 %v669, %v757
        %v759 = vpop.f32.mrf.mxu0
        %v760 = vadd.f32 %v671, %v759
        %761 = vmatmul.bf16.gmra.mxu0 %v408
        %v762 = vpop.f32.mrf.mxu0
        %v763 = vadd.f32 %v674, %v762
        %v764 = vpop.f32.mrf.mxu0
        %v765 = vadd.f32 %v676, %v764
        %766 = vmatmul.bf16.gmra.mxu0 %v410
        %v767 = vpop.f32.mrf.mxu0
        %v768 = vadd.f32 %v679, %v767
        %v769 = vpop.f32.mrf.mxu0
        %v770 = vadd.f32 %v681, %v769
        %771 = vmatmul.bf16.gmra.mxu0 %v412
        %v772 = vpop.f32.mrf.mxu0
        %v773 = vadd.f32 %v684, %v772
        %v774 = vpop.f32.mrf.mxu0
        %v775 = vadd.f32 %v686, %v774
        %776 = vmatmul.bf16.gmra.mxu0 %v414
        %v777 = vpop.f32.mrf.mxu0
        %v778 = vadd.f32 %v689, %v777
        %v779 = vpop.f32.mrf.mxu0
        %v780 = vadd.f32 %v691, %v779
        %781 = vmatmul.bf16.gmra.mxu0 %v416
        %v782 = vpop.f32.mrf.mxu0
        %v783 = vadd.f32 %v694, %v782
        %v784 = vpop.f32.mrf.mxu0
        %v785 = vadd.f32 %v696, %v784
        %786 = vdwg.mxu0
        %787 = vmatpush.bf16.msra.mxu0 %v560
        %788 = vmatpush.bf16.msra.mxu0 %v558
        %789 = vmatpush.bf16.msra.mxu0 %v556
        %790 = vmatpush.bf16.msra.mxu0 %v554
        %791 = vmatpush.bf16.msra.mxu0 %v552
        %792 = vmatpush.bf16.msra.mxu0 %v550
        %793 = vmatpush.bf16.msra.mxu0 %v548
        %794 = vmatpush.bf16.msra.mxu0 %v546
        %795 = vmatmul.bf16.gmra.mxu0 %v385
        %v796 = vpop.f32.mrf.mxu0
        %v797 = vadd.f32 0.0, %v796
        %v798 = vpop.f32.mrf.mxu0
        %v799 = vadd.f32 0.0, %v798
        %800 = vmatmul.bf16.gmra.mxu0 %v387
        %v801 = vpop.f32.mrf.mxu0
        %v802 = vadd.f32 0.0, %v801
        %v803 = vpop.f32.mrf.mxu0
        %v804 = vadd.f32 0.0, %v803
        %805 = vmatmul.bf16.gmra.mxu0 %v389
        %v806 = vpop.f32.mrf.mxu0
        %v807 = vadd.f32 0.0, %v806
        %v808 = vpop.f32.mrf.mxu0
        %v809 = vadd.f32 0.0, %v808
        %810 = vmatmul.bf16.gmra.mxu0 %v391
        %v811 = vpop.f32.mrf.mxu0
        %v812 = vadd.f32 0.0, %v811
        %v813 = vpop.f32.mrf.mxu0
        %v814 = vadd.f32 0.0, %v813
        %815 = vmatmul.bf16.gmra.mxu0 %v393
        %v816 = vpop.f32.mrf.mxu0
        %v817 = vadd.f32 0.0, %v816
        %v818 = vpop.f32.mrf.mxu0
        %v819 = vadd.f32 0.0, %v818
        %820 = vmatmul.bf16.gmra.mxu0 %v395
        %v821 = vpop.f32.mrf.mxu0
        %v822 = vadd.f32 0.0, %v821
        %v823 = vpop.f32.mrf.mxu0
        %v824 = vadd.f32 0.0, %v823
        %825 = vmatmul.bf16.gmra.mxu0 %v397
        %v826 = vpop.f32.mrf.mxu0
        %v827 = vadd.f32 0.0, %v826
        %v828 = vpop.f32.mrf.mxu0
        %v829 = vadd.f32 0.0, %v828
        %830 = vmatmul.bf16.gmra.mxu0 %v399
        %v831 = vpop.f32.mrf.mxu0
        %v832 = vadd.f32 0.0, %v831
        %v833 = vpop.f32.mrf.mxu0
        %v834 = vadd.f32 0.0, %v833
        %835 = vmatmul.bf16.gmra.mxu0 %v401
        %v836 = vpop.f32.mrf.mxu0
        %v837 = vadd.f32 0.0, %v836
        %v838 = vpop.f32.mrf.mxu0
        %v839 = vadd.f32 0.0, %v838
        %840 = vmatmul.bf16.gmra.mxu0 %v403
        %v841 = vpop.f32.mrf.mxu0
        %v842 = vadd.f32 0.0, %v841
        %v843 = vpop.f32.mrf.mxu0
        %v844 = vadd.f32 0.0, %v843
        %845 = vmatmul.bf16.gmra.mxu0 %v405
        %v846 = vpop.f32.mrf.mxu0
        %v847 = vadd.f32 0.0, %v846
        %v848 = vpop.f32.mrf.mxu0
        %v849 = vadd.f32 0.0, %v848
        %850 = vmatmul.bf16.gmra.mxu0 %v407
        %v851 = vpop.f32.mrf.mxu0
        %v852 = vadd.f32 0.0, %v851
        %v853 = vpop.f32.mrf.mxu0
        %v854 = vadd.f32 0.0, %v853
        %855 = vmatmul.bf16.gmra.mxu0 %v409
        %v856 = vpop.f32.mrf.mxu0
        %v857 = vadd.f32 0.0, %v856
        %v858 = vpop.f32.mrf.mxu0
        %v859 = vadd.f32 0.0, %v858
        %860 = vmatmul.bf16.gmra.mxu0 %v411
        %v861 = vpop.f32.mrf.mxu0
        %v862 = vadd.f32 0.0, %v861
        %v863 = vpop.f32.mrf.mxu0
        %v864 = vadd.f32 0.0, %v863
        %865 = vmatmul.bf16.gmra.mxu0 %v413
        %v866 = vpop.f32.mrf.mxu0
        %v867 = vadd.f32 0.0, %v866
        %v868 = vpop.f32.mrf.mxu0
        %v869 = vadd.f32 0.0, %v868
        %870 = vmatmul.bf16.gmra.mxu0 %v415
        %v871 = vpop.f32.mrf.mxu0
        %v872 = vadd.f32 0.0, %v871
        %v873 = vpop.f32.mrf.mxu0
        %v874 = vadd.f32 0.0, %v873
        %875 = vdwg.mxu0
        %876 = vmatpush.bf16.msra.mxu0 %v576
        %877 = vmatpush.bf16.msra.mxu0 %v574
        %878 = vmatpush.bf16.msra.mxu0 %v572
        %879 = vmatpush.bf16.msra.mxu0 %v570
        %880 = vmatpush.bf16.msra.mxu0 %v568
        %881 = vmatpush.bf16.msra.mxu0 %v566
        %882 = vmatpush.bf16.msra.mxu0 %v564
        %883 = vmatpush.bf16.msra.mxu0 %v562
        %884 = vmatmul.bf16.gmra.mxu0 %v386
        %v885 = vpop.f32.mrf.mxu0
        %v886 = vadd.f32 %v797, %v885
        %v887 = vpop.f32.mrf.mxu0
        %v888 = vadd.f32 %v799, %v887
        %889 = vmatmul.bf16.gmra.mxu0 %v388
        %v890 = vpop.f32.mrf.mxu0
        %v891 = vadd.f32 %v802, %v890
        %v892 = vpop.f32.mrf.mxu0
        %v893 = vadd.f32 %v804, %v892
        %894 = vmatmul.bf16.gmra.mxu0 %v390
        %v895 = vpop.f32.mrf.mxu0
        %v896 = vadd.f32 %v807, %v895
        %v897 = vpop.f32.mrf.mxu0
        %v898 = vadd.f32 %v809, %v897
        %899 = vmatmul.bf16.gmra.mxu0 %v392
        %v900 = vpop.f32.mrf.mxu0
        %v901 = vadd.f32 %v812, %v900
        %v902 = vpop.f32.mrf.mxu0
        %v903 = vadd.f32 %v814, %v902
        %904 = vmatmul.bf16.gmra.mxu0 %v394
        %v905 = vpop.f32.mrf.mxu0
        %v906 = vadd.f32 %v817, %v905
        %v907 = vpop.f32.mrf.mxu0
        %v908 = vadd.f32 %v819, %v907
        %909 = vmatmul.bf16.gmra.mxu0 %v396
        %v910 = vpop.f32.mrf.mxu0
        %v911 = vadd.f32 %v822, %v910
        %v912 = vpop.f32.mrf.mxu0
        %v913 = vadd.f32 %v824, %v912
        %914 = vmatmul.bf16.gmra.mxu0 %v398
        %v915 = vpop.f32.mrf.mxu0
        %v916 = vadd.f32 %v827, %v915
        %v917 = vpop.f32.mrf.mxu0
        %v918 = vadd.f32 %v829, %v917
        %919 = vmatmul.bf16.gmra.mxu0 %v400
        %v920 = vpop.f32.mrf.mxu0
        %v921 = vadd.f32 %v832, %v920
        %v922 = vpop.f32.mrf.mxu0
        %v923 = vadd.f32 %v834, %v922
        %924 = vmatmul.bf16.gmra.mxu0 %v402
        %v925 = vpop.f32.mrf.mxu0
        %v926 = vadd.f32 %v837, %v925
        %v927 = vpop.f32.mrf.mxu0
        %v928 = vadd.f32 %v839, %v927
        %929 = vmatmul.bf16.gmra.mxu0 %v404
        %v930 = vpop.f32.mrf.mxu0
        %v931 = vadd.f32 %v842, %v930
        %v932 = vpop.f32.mrf.mxu0
        %v933 = vadd.f32 %v844, %v932
        %934 = vmatmul.bf16.gmra.mxu0 %v406
        %v935 = vpop.f32.mrf.mxu0
        %v936 = vadd.f32 %v847, %v935
        %v937 = vpop.f32.mrf.mxu0
        %v938 = vadd.f32 %v849, %v937
        %939 = vmatmul.bf16.gmra.mxu0 %v408
        %v940 = vpop.f32.mrf.mxu0
        %v941 = vadd.f32 %v852, %v940
        %v942 = vpop.f32.mrf.mxu0
        %v943 = vadd.f32 %v854, %v942
        %944 = vmatmul.bf16.gmra.mxu0 %v410
        %v945 = vpop.f32.mrf.mxu0
        %v946 = vadd.f32 %v857, %v945
        %v947 = vpop.f32.mrf.mxu0
        %v948 = vadd.f32 %v859, %v947
        %949 = vmatmul.bf16.gmra.mxu0 %v412
        %v950 = vpop.f32.mrf.mxu0
        %v951 = vadd.f32 %v862, %v950
        %v952 = vpop.f32.mrf.mxu0
        %v953 = vadd.f32 %v864, %v952
        %954 = vmatmul.bf16.gmra.mxu0 %v414
        %v955 = vpop.f32.mrf.mxu0
        %v956 = vadd.f32 %v867, %v955
        %v957 = vpop.f32.mrf.mxu0
        %v958 = vadd.f32 %v869, %v957
        %959 = vmatmul.bf16.gmra.mxu0 %v416
        %v960 = vpop.f32.mrf.mxu0
        %v961 = vadd.f32 %v872, %v960
        %v962 = vpop.f32.mrf.mxu0
        %v963 = vadd.f32 %v874, %v962
        %964 = vdwg.mxu0
        %v965 = vpack.c.bf16 %v886, %v708
        %v966 = vpack.c.bf16 %v888, %v710
        %v967 = vpack.c.bf16 %v891, %v713
        %v968 = vpack.c.bf16 %v893, %v715
        %v969 = vpack.c.bf16 %v896, %v718
        %v970 = vpack.c.bf16 %v898, %v720
        %v971 = vpack.c.bf16 %v901, %v723
        %v972 = vpack.c.bf16 %v903, %v725
        %v973 = vpack.c.bf16 %v906, %v728
        %v974 = vpack.c.bf16 %v908, %v730
        %v975 = vpack.c.bf16 %v911, %v733
        %v976 = vpack.c.bf16 %v913, %v735
        %v977 = vpack.c.bf16 %v916, %v738
        %v978 = vpack.c.bf16 %v918, %v740
        %v979 = vpack.c.bf16 %v921, %v743
        %v980 = vpack.c.bf16 %v923, %v745
        %v981 = vpack.c.bf16 %v926, %v748
        %v982 = vpack.c.bf16 %v928, %v750
        %v983 = vpack.c.bf16 %v931, %v753
        %v984 = vpack.c.bf16 %v933, %v755
        %v985 = vpack.c.bf16 %v936, %v758
        %v986 = vpack.c.bf16 %v938, %v760
        %v987 = vpack.c.bf16 %v941, %v763
        %v988 = vpack.c.bf16 %v943, %v765
        %v989 = vpack.c.bf16 %v946, %v768
        %v990 = vpack.c.bf16 %v948, %v770
        %v991 = vpack.c.bf16 %v951, %v773
        %v992 = vpack.c.bf16 %v953, %v775
        %v993 = vpack.c.bf16 %v956, %v778
        %v994 = vpack.c.bf16 %v958, %v780
        %v995 = vpack.c.bf16 %v961, %v783
        %v996 = vpack.c.bf16 %v963, %v785
        %997 = vst [vmem:[%s220] sm:$0xff] %v965
        %998 = vst [vmem:[%s220 + $0x8] sm:$0xff] %v966
        %999 = vst [vmem:[%s220 + $0x10] sm:$0xff] %v967
        %1000 = vst [vmem:[%s220 + $0x18] sm:$0xff] %v968
        %1001 = vst [vmem:[%s220 + $0x20] sm:$0xff] %v969
        %1002 = vst [vmem:[%s220 + $0x28] sm:$0xff] %v970
        %1003 = vst [vmem:[%s220 + $0x30] sm:$0xff] %v971
        %1004 = vst [vmem:[%s220 + $0x38] sm:$0xff] %v972
        %1005 = vst [vmem:[%s220 + $0x40] sm:$0xff] %v973
        %1006 = vst [vmem:[%s220 + $0x48] sm:$0xff] %v974
        %1007 = vst [vmem:[%s220 + $0x50] sm:$0xff] %v975
        %1008 = vst [vmem:[%s220 + $0x58] sm:$0xff] %v976
        %1009 = vst [vmem:[%s220 + $0x60] sm:$0xff] %v977
        %1010 = vst [vmem:[%s220 + $0x68] sm:$0xff] %v978
        %1011 = vst [vmem:[%s220 + $0x70] sm:$0xff] %v979
        %1012 = vst [vmem:[%s220 + $0x78] sm:$0xff] %v980
        %1013 = vst [vmem:[%s220 + $0x80] sm:$0xff] %v981
        %1014 = vst [vmem:[%s220 + $0x88] sm:$0xff] %v982
        %1015 = vst [vmem:[%s220 + $0x90] sm:$0xff] %v983
        %1016 = vst [vmem:[%s220 + $0x98] sm:$0xff] %v984
        %1017 = vst [vmem:[%s220 + $0xa0] sm:$0xff] %v985
        %1018 = vst [vmem:[%s220 + $0xa8] sm:$0xff] %v986
        %1019 = vst [vmem:[%s220 + $0xb0] sm:$0xff] %v987
        %1020 = vst [vmem:[%s220 + $0xb8] sm:$0xff] %v988
        %1021 = vst [vmem:[%s220 + $0xc0] sm:$0xff] %v989
        %1022 = vst [vmem:[%s220 + $0xc8] sm:$0xff] %v990
        %1023 = vst [vmem:[%s220 + $0xd0] sm:$0xff] %v991
        %1024 = vst [vmem:[%s220 + $0xd8] sm:$0xff] %v992
        %1025 = vst [vmem:[%s220 + $0xe0] sm:$0xff] %v993
        %1026 = vst [vmem:[%s220 + $0xe8] sm:$0xff] %v994
        %1027 = vst [vmem:[%s220 + $0xf0] sm:$0xff] %v995
        %1028 = vst [vmem:[%s220 + $0xf8] sm:$0xff] %v996
        %s1029 = sand.u32 %s96, 1
        %s1030 = scalar_lea.sflag [#allocation4], %s1029
        %s1031 = sand.u32 %s96, 1
        %s1032 = smul.addr %s1031, 256
        %s1033 = scalar_lea.vmem [#allocation7], %s1032
        // Predicated region
        $region37: #{tpu_custom_call.1} parent=27 // pred_check
          %p1034 = pneg %p106
        $region38: #{tpu_custom_call.1} parent=27 // pred_check_branch
          %1036 = sbr.rel (%p1034) target = $region40
        $region39: #{tpu_custom_call.1} parent=27 // pred_region
          %s1037 = smul.u32 32, %s26
          %s1038 = smul.u32 2, %s27
          %1040 = vsyncadd %s1030, 0
          %s1041 = smul.addr %s1037, 6
          %s1042 = sadd.s32 %s1038, %s1041
          %s1043 = smul.addr %s1042, 4
          %s1044 = scalar_lea.hbm %s2, %s1043
          %s1045 = sshll.u32 %s1033, 4
          %s1046 = int_to_ptr.vmem [resolvable:$true] %s1045
          %s1047 = sshll.u32 %s1044, 4
          %s1048 = int_to_ptr.hbm [resolvable:$true] %s1047
          %1053 = dma.vmem_to_hbm [thread:$0]  %s1046, 4096, %s1048, %s1030, 128, 384, 8
        $region40: #{tpu_custom_call.1} parent=27 // pred_fallthru
          _
      $region28: #{tpu_custom_call.1} parent=5 // pred_fallthru
        _
      %p1054 = scmp.le.s32.totalorder 2, %s17
      // Predicated region
      $region41: #{tpu_custom_call.1} parent=5 // pred_check
        %p1055 = pneg %p1054
      $region42: #{tpu_custom_call.1} parent=5 // pred_check_branch
        %1057 = sbr.rel (%p1055) target = $region44
      $region43: #{tpu_custom_call.1} parent=5 // pred_region
        %s1058 = ssub.s32 %s17, 2
        // Predicated region
        $region45: #{tpu_custom_call.1} parent=43 // pred_check
          %p1059 = pneg %p112
        $region46: #{tpu_custom_call.1} parent=43 // pred_check_branch
          %1061 = sbr.rel (%p1059) target = $region48
        $region47: #{tpu_custom_call.1} parent=43 // pred_region
          %s1062 = sand.u32 %s97, 1
          %s1063 = scalar_lea.sflag [#allocation4], %s1062
          %s1064 = sand.u32 %s97, 1
          %s1065 = smul.addr %s1064, 256
          %s1066 = scalar_lea.vmem [#allocation7], %s1065
          %1068 = dma.done %s1063, 4096
        $region48: #{tpu_custom_call.1} parent=43 // pred_fallthru
          _
      $region44: #{tpu_custom_call.1} parent=5 // pred_fallthru
        _
    $region6: #{tpu_custom_call.1} parent=1 // loop_footer
      %s21 = sadd.s32 1, %s17
    $region7: #{tpu_custom_call.1} parent=1 // loop_footer_branch
      %16 = sbr.rel target = $region3
    $region8: #{tpu_custom_call.1} parent=1 // loop_exit
      _
    %1069 = vsyncpa [#allocation3], 1
    %s1070 = scalar_lea.sflag [#allocation3], 1
    %1071 = vsyncpa %s1070, 1
    %1072 = vsyncpa [#allocation6], 1
    %s1073 = scalar_lea.sflag [#allocation6], 1
    %1074 = vsyncpa %s1073, 1
    %1075 = vsyncpa [#allocation4], 1
    %s1076 = scalar_lea.sflag [#allocation4], 1
    %1077 = vsyncpa %s1076, 1

</llo_original>
